<compile_context>
chip_gen: v6e
topology: v6e:2x2x1
jax: 0.10.0
libtpu: 0.0.40
codegen_flags: <defaults>
</compile_context>

<pallas_src>
import math

import jax
import jax.numpy as jnp
from jax.experimental import pallas as pl
from jax.experimental.pallas import tpu as pltpu


def _cdiv(a, b):
    return (a + b - 1) // b


def _round_up(a, m):
    return _cdiv(a, m) * m


def _pe_add_kernel(x_ref, o_ref, pe_ref):
    # x_ref / o_ref block: (tB, tS, D); pe_ref scratch: (1, tS, D) in x.dtype.
    tS = x_ref.shape[1]
    D = x_ref.shape[2]
    s = pl.program_id(0)   # S-tile index (outer, "parallel")
    b = pl.program_id(1)   # batch-tile index (inner, "arbitrary")

    # PE is batch-invariant: build the tile once per S-tile, reuse for b > 0.
    @pl.when(b == 0)
    def _():
        # Column quantities on a narrow (1, 1, D) shape (exp only over D).
        col = jax.lax.broadcasted_iota(jnp.int32, (1, 1, D), 2)          # (1,1,D)
        parity = col & 1                                                 # 0 even / 1 odd
        even_col = (col - parity).astype(jnp.float32)                    # 2*floor(col/2)
        inv_freq = jnp.exp(even_col * (-math.log(10000.0) / D))          # (1,1,D)

        # Row (position) index, offset by this S-tile's start.
        pos = (s * tS
               + jax.lax.broadcasted_iota(jnp.int32, (1, tS, 1), 1)
               ).astype(jnp.float32)                                     # (1,tS,1)

        arg = pos * inv_freq                                             # (1,tS,D)
        # Direct cos for odd columns (exactly matches the reference math).
        pe = jnp.where(parity == 0, jnp.sin(arg), jnp.cos(arg))          # (1,tS,D)
        pe_ref[...] = pe.astype(pe_ref.dtype)

    # Steady state: pure broadcast add, no casts / relayouts.
    o_ref[...] = x_ref[...] + pe_ref[...]


def positional_encoding_add(x, *, target_block_bytes=4 * 1024 * 1024):
    """x: (B, S, D) -> x + pe[None, :S, :]  (same semantics as the nn.Module)."""
    B, S, D = x.shape
    assert D % 2 == 0, "d_model must be even (as the PyTorch module requires)"
    itemsize = jnp.dtype(x.dtype).itemsize

    # --- batch block: fold the whole batch when a minimal (8-row) block fits. ---
    min_rows = min(S, 8)
    if B * min_rows * D * itemsize <= target_block_bytes:
        tB = B
    else:
        tB = max(target_block_bytes // (min_rows * D * itemsize), 1)
        tB = min(tB, B)

    # --- S block sized by bytes: multiple of 8 sublanes, or the full extent. ---
    row_bytes = tB * D * itemsize
    tS = max(target_block_bytes // row_bytes, 1)
    if tS >= S:
        tS = S
    else:
        tS = max((tS // 8) * 8, 8)
        tS = min(tS, S)
    # v7x megacore: ensure the "parallel" axis has >= 2 tiles when S allows.
    if S >= 16:
        tS = min(tS, _round_up(_cdiv(S, 2), 8))

    grid = (_cdiv(S, tS), _cdiv(B, tB))   # S-tiles outer, batch inner

    return pl.pallas_call(
        _pe_add_kernel,
        out_shape=jax.ShapeDtypeStruct((B, S, D), x.dtype),
        grid=grid,
        in_specs=[pl.BlockSpec((tB, tS, D), lambda s, b: (b, s, 0))],
        out_specs=pl.BlockSpec((tB, tS, D), lambda s, b: (b, s, 0)),
        scratch_shapes=[pltpu.VMEM((1, tS, D), x.dtype)],
        input_output_aliases={0: 0},        # PE add is naturally in-place
        compiler_params=pltpu.CompilerParams(
            dimension_semantics=("parallel", "arbitrary"),
            vmem_limit_bytes=32 * 1024 * 1024),
    )(x)


def _reference(x, max_len=5000):
    """Pure-JAX reference mirroring the PyTorch module exactly."""
    B, S, D = x.shape
    position = jnp.arange(0, max_len, dtype=jnp.float32)[:, None]          # [max_len, 1]
    div_term = jnp.exp(jnp.arange(0, D, 2, dtype=jnp.float32)
                       * (-math.log(10000.0) / D))                         # [D/2]
    pe = jnp.zeros((max_len, D), jnp.float32)
    pe = pe.at[:, 0::2].set(jnp.sin(position * div_term))
    pe = pe.at[:, 1::2].set(jnp.cos(position * div_term))
    return x + pe[None, :S, :].astype(x.dtype)


if __name__ == "__main__":
    key1, key2 = jax.random.split(jax.random.PRNGKey(0))

    # Shape implied by the module's forward: (batch, seq_len, d_model).
    B, S, D = 2, 8, 32
    x = jax.random.normal(key1, (B, S, D), dtype=jnp.float32)
    out = jax.block_until_ready(positional_encoding_add(x))
    ref = _reference(x)
    assert out.shape == ref.shape and out.dtype == ref.dtype
    assert jnp.allclose(out, ref, atol=1e-5, rtol=1e-5), "mismatch vs reference (small)"

    # Second small shape exercising multiple S-tiles (incl. a ragged last tile)
    # and the v7x two-tile split path.
    B2, S2, D2 = 2, 40, 128
    x2 = jax.random.normal(key2, (B2, S2, D2), dtype=jnp.float32)
    out2 = jax.block_until_ready(positional_encoding_add(x2))
    ref2 = _reference(x2)
    assert out2.shape == ref2.shape and out2.dtype == ref2.dtype
    assert jnp.allclose(out2, ref2, atol=1e-5, rtol=1e-5), "mismatch vs reference (tiled)"

    print("KERNEL_OK")
</pallas_src>

<mosaic_0001>
module attributes {stable_mosaic.version = 11 : i64} {
  func.func @_pe_add_kernel(%arg0: i32, %arg1: i32, %arg2: memref<2x8x32xf32, #tpu.memory_space<vmem>>, %arg3: memref<2x8x32xf32, #tpu.memory_space<vmem>>, %arg4: memref<1x8x32xf32, #tpu.memory_space<vmem>>) attributes {dimension_semantics = [#tpu.dimension_semantics<parallel>, #tpu.dimension_semantics<arbitrary>], iteration_bounds = array<i64: 1, 1>, scalar_prefetch = 0 : i64, scratch_operands = 1 : i64, tpu.core_type = #tpu.core_type<tc>, window_params = [{transform_indices = @transform_0, window_bounds = array<i64: 2, 8, 32>}, {transform_indices = @transform_1, window_bounds = array<i64: 2, 8, 32>}]} {
    %c0_i32 = arith.constant 0 : i32
    %0 = arith.cmpi eq, %arg1, %c0_i32 : i32
    %1 = arith.extui %0 : i1 to i32
    %c0_i32_0 = arith.constant 0 : i32
    %2 = arith.cmpi ne, %1, %c0_i32_0 : i32
    scf.if %2 {
      %8 = tpu.iota {dimensions = array<i32: 2>} : vector<1x1x32xi32>
      %c1_i32 = arith.constant 1 : i32
      %9 = vector.broadcast %c1_i32 : i32 to vector<1x1x32xi32>
      %10 = arith.andi %8, %9 : vector<1x1x32xi32>
      %11 = arith.subi %8, %10 : vector<1x1x32xi32>
      %12 = arith.sitofp %11 : vector<1x1x32xi32> to vector<1x1x32xf32>
      %cst = arith.constant -0.287823141 : f32
      %13 = vector.broadcast %cst : f32 to vector<1x1x32xf32>
      %14 = arith.mulf %12, %13 : vector<1x1x32xf32>
      %15 = math.exp %14 : vector<1x1x32xf32>
      %c8_i32 = arith.constant 8 : i32
      %16 = arith.muli %arg0, %c8_i32 : i32
      %17 = tpu.iota {dimensions = array<i32: 1>} : vector<1x8x1xi32>
      %18 = vector.broadcast %16 : i32 to vector<1x8x1xi32>
      %19 = arith.addi %18, %17 : vector<1x8x1xi32>
      %20 = arith.sitofp %19 : vector<1x8x1xi32> to vector<1x8x1xf32>
      %21 = vector.broadcast %20 : vector<1x8x1xf32> to vector<1x8x32xf32>
      %22 = vector.broadcast %15 : vector<1x1x32xf32> to vector<1x8x32xf32>
      %23 = arith.mulf %21, %22 : vector<1x8x32xf32>
      %c0_i32_9 = arith.constant 0 : i32
      %24 = vector.broadcast %c0_i32_9 : i32 to vector<1x1x32xi32>
      %25 = arith.cmpi eq, %10, %24 : vector<1x1x32xi32>
      %26 = math.sin %23 : vector<1x8x32xf32>
      %27 = math.cos %23 : vector<1x8x32xf32>
      %28 = vector.shape_cast %25 : vector<1x1x32xi1> to vector<1x1x32xi1>
      %29 = vector.broadcast %28 : vector<1x1x32xi1> to vector<1x8x32xi1>
      %30 = arith.select %29, %26, %27 : vector<1x8x32xi1>, vector<1x8x32xf32>
      %c0_10 = arith.constant 0 : index
      %c0_11 = arith.constant 0 : index
      %c0_12 = arith.constant 0 : index
      %31 = vector.load %arg4[%c0_10, %c0_11, %c0_12] : memref<1x8x32xf32, #tpu.memory_space<vmem>>, vector<1x8x32xf32>
      tpu.vector_store %arg4[%c0_10, %c0_11, %c0_12], %30 {strides = array<i32>} : memref<1x8x32xf32, #tpu.memory_space<vmem>>, vector<1x8x32xf32>,
    } else {
    }
    %c0 = arith.constant 0 : index
    %c0_1 = arith.constant 0 : index
    %c0_2 = arith.constant 0 : index
    %3 = vector.load %arg2[%c0, %c0_1, %c0_2] : memref<2x8x32xf32, #tpu.memory_space<vmem>>, vector<2x8x32xf32>
    %c0_3 = arith.constant 0 : index
    %c0_4 = arith.constant 0 : index
    %c0_5 = arith.constant 0 : index
    %4 = vector.load %arg4[%c0_3, %c0_4, %c0_5] : memref<1x8x32xf32, #tpu.memory_space<vmem>>, vector<1x8x32xf32>
    %5 = vector.broadcast %4 : vector<1x8x32xf32> to vector<2x8x32xf32>
    %6 = arith.addf %3, %5 : vector<2x8x32xf32>
    %c0_6 = arith.constant 0 : index
    %c0_7 = arith.constant 0 : index
    %c0_8 = arith.constant 0 : index
    %7 = vector.load %arg3[%c0_6, %c0_7, %c0_8] : memref<2x8x32xf32, #tpu.memory_space<vmem>>, vector<2x8x32xf32>
    tpu.vector_store %arg3[%c0_6, %c0_7, %c0_8], %6 {strides = array<i32>} : memref<2x8x32xf32, #tpu.memory_space<vmem>>, vector<2x8x32xf32>,
    return
  }
  func.func @transform_0(%arg0: i32, %arg1: i32) -> (i32, i32, i32) {
    %c0_i32 = arith.constant 0 : i32
    %c0_i32_0 = arith.constant 0 : i32
    return %arg1, %arg0, %c0_i32 : i32, i32, i32
  }
  func.func @transform_1(%arg0: i32, %arg1: i32) -> (i32, i32, i32) {
    %c0_i32 = arith.constant 0 : i32
    %c0_i32_0 = arith.constant 0 : i32
    return %arg1, %arg0, %c0_i32 : i32, i32, i32
  }
}

</mosaic_0001>

<llo_original>
// kernel: tpu_custom_call.1
$region0: #{tpu_custom_call.1}
  #allocation0 [shape = 'u32[]', space=smem, size = 0x4, offset = 0x4, fixed_abs, tag = 'smem constant byte address 0x4 - core index']
  #allocation1 [shape = 'u32[144,128]{1,0:T(1,128)}', space=vmem, size = 0x12000, scoped, tag = 'internal scratch']
  #allocation2 [shape = 'f32[1,8,32]{2,1,0:T(8,128)}', space=vmem, size = 0x1000, scoped, tag = 'scratch operand']
  %s0 = inlined_call_operand.hbm [shape: f32[2,8,32], index: 0, kind: input, shape index: {}, may-alias: {0,1}]
  %s1 = inlined_call_operand.hbm [shape: f32[2,8,32], index: 1, kind: output, shape index: {}, may-alias: {0,1}]
  %s2 = sld [smem:[#allocation0]]
  $region22: #{tpu_custom_call.1} parent=0
    _
  %s4 = ssub.s32 1, %s2
  %s5 = scalar_select 0, %s4, %s2
  $region1: #{tpu_custom_call.1} parent=0
    #allocation3 [shape = 'u8[8192]{0}', space=vmem, size = 0x2000, scoped, tag = 'input window, operand 0, single buffered']
    #allocation4 [shape = 's32[1]{0}', space=sflag, size = 0x4, scoped, tag = 'scoped memory for tpu_custom_call.1']
    #allocation5 [shape = 's32[1]{0}', space=sflag, size = 0x4, scoped, tag = 'scoped memory for tpu_custom_call.1']
    #allocation6 [shape = 'u8[8192]{0}', space=vmem, size = 0x2000, scoped, tag = 'output window, operand 0, single buffered']
    %6 = vsyncpa [#allocation4], 0
    %7 = vsyncpa [#allocation5], 0
    // Predicated region
    $region2: #{tpu_custom_call.1} parent=1 // pred_check
      _
    $region3: #{tpu_custom_call.1} parent=1 // pred_check_branch
      %9 = sbr.rel (0) target = $region5
    $region4: #{tpu_custom_call.1} parent=1 // pred_region
      %s11 = ssub.s32 256, 256
      %12 = vsyncadd [#allocation4], %s11
      %s13 = sshll.u32 [#allocation3], 4
      %s14 = int_to_ptr.vmem [resolvable:$true] %s13
      %19 = dma.hbm_to_vmem [thread:$0]  %s0, 256, %s14, [#allocation4], 128, 128, 8
    $region5: #{tpu_custom_call.1} parent=1 // pred_fallthru
      _
    // Predicated region
    $region6: #{tpu_custom_call.1} parent=1 // pred_check
      _
    $region7: #{tpu_custom_call.1} parent=1 // pred_check_branch
      %21 = sbr.rel (0) target = $region9
    $region8: #{tpu_custom_call.1} parent=1 // pred_region
      %22 = dma.done [#allocation4], 256
    $region9: #{tpu_custom_call.1} parent=1 // pred_fallthru
      _
    %p23 = scmp.eq.s32.totalorder 0, 0
    // Predicated region
    $region10: #{tpu_custom_call.1} parent=1 // pred_check
      %p24 = pneg %p23
    $region11: #{tpu_custom_call.1} parent=1 // pred_check_branch
      %26 = sbr.rel (%p24) target = $region13
    $region12: #{tpu_custom_call.1} parent=1 // pred_region
      %v27 = vlaneseq
      %v28 = vand.u32 %v27, 127
      %v29 = vand.u32 %v28, 1
      %v30 = vsub.s32 %v28, %v29
      %v31 = vcvt.s32.f32 %v30
      %v32 = vmul.f32 %v31, -0.28782314
      %v33 = vmul.f32 %v32, 1.442695
      %v34 = vpow.pop %v33
      %s35 = smul.u32 0, 8
      %v36 = vlaneseq
      %v37 = vshrl.u32 %v36, 7
      %v38 = vstv %s35
      %v39 = vadd.s32 %v38, %v37
      %v40 = vcvt.s32.f32 %v39
      %v41 = vmul.f32 %v40, %v34
      %vm42 = vcmp.eq.s32.totalorder %v29, 0
      %v43 = vand.u32 2147483647, %v41
      %vm44 = vcmp.le.f32.partialorder %v43, 0.7853982
      %vm45 = vcmp.lt.s32.totalorder %v41, 0
      %v46 = vand.u32 %v41, 2139095040
      %v47 = vshrl.u32 %v46, 23
      %v48 = vsub.s32 %v47, 127
      %v49 = vand.u32 2147483647, %v41
      %v50 = vand.u32 %v49, 8388607
      %v51 = vor.u32 %v50, 8388608
      %v52 = vsub.s32 0, %v51
      %v53 = vadd.s32 %v48, 1
      %vm54 = vcmp.gt.s32.totalorder %v53, 0
      %v55 = vsel %vm54, %v53, 0
      %v56 = vshrl.u32 %v55, 5
      %v57 = vand.u32 %v55, 31
      %v58 = vsub.s32 32, %v57
      %v59 = vshrl.u32 683565275, %v58
      %v60 = vshll.u32 683565275, %v57
      %v61 = vshrl.u32 2475754826, %v58
      %v62 = vor.u32 %v60, %v61
      %v63 = vshll.u32 2475754826, %v57
      %v64 = vshrl.u32 2131351028, %v58
      %v65 = vor.u32 %v63, %v64
      %v66 = vshll.u32 2131351028, %v57
      %v67 = vshrl.u32 2102212464, %v58
      %v68 = vor.u32 %v66, %v67
      %v69 = vshll.u32 2102212464, %v57
      %v70 = vshrl.u32 920167782, %v58
      %v71 = vor.u32 %v69, %v70
      %v72 = vshll.u32 920167782, %v57
      %v73 = vshrl.u32 1326507024, %v58
      %v74 = vor.u32 %v72, %v73
      %vm75 = vcmp.lt.s32.totalorder %v56, 1
      %vm76 = vcmp.lt.s32.totalorder %v56, 2
      %vm77 = vcmp.lt.s32.totalorder %v56, 3
      %vm78 = vcmp.lt.s32.totalorder %v56, 4
      %v79 = vsel %vm75, %v59, %v62
      %v80 = vsel %vm78, %v68, 2102212464
      %v81 = vsel %vm77, %v65, %v80
      %v82 = vsel %vm76, %v79, %v81
      %v83 = vsel %vm75, %v62, %v65
      %v84 = vsel %vm78, %v71, 920167782
      %v85 = vsel %vm77, %v68, %v84
      %v86 = vsel %vm76, %v83, %v85
      %v87 = vsel %vm75, %v65, %v68
      %v88 = vsel %vm78, %v74, 1326507024
      %v89 = vsel %vm77, %v71, %v88
      %v90 = vsel %vm76, %v87, %v89
      %v91 = vshll.u32 %v51, 8
      %v92 = vmul.u32.u64.compose %v91, %v90
      %v93 = vextract.low.u32 %v92
      %v94 = vextract.high.u32 %v92
      %v95 = vmul.u32.u64.compose %v91, %v86
      %v96 = vextract.low.u32 %v95
      %v97 = vextract.high.u32 %v95
      %v98 = vmul.u32 %v91, %v82
      %v99 = vadd.s32 %v94, %v96
      %vm100 = vc.u32 %v94, %v96
      %v101 = vadd.s32 %v97, 1
      %v102 = vsel %vm100, %v101, %v97
      %v103 = vadd.s32 %v98, %v102
      %v104 = vadd.s32 %v103, 536870912
      %v105 = vshrl.u32 %v104, 30
      %v106 = vshll.u32 %v105, 30
      %v107 = vsub.s32 %v103, %v106
      %vm108 = vcmp.lt.s32.totalorder %v107, 0
      %v109 = vsub.s32 0, %v107
      %v110 = vsel %vm108, %v109, %v107
      %v111 = vclz %v110
      %v112 = vsub.s32 %v111, 2
      %vm113 = vcmp.gt.s32.totalorder 0, %v112
      %v114 = vsel %vm113, 0, %v112
      %v115 = vsub.s32 32, %v114
      %v116 = vshll.u32 %v107, %v114
      %v117 = vshrl.u32 %v99, %v115
      %v118 = vor.u32 %v116, %v117
      %v119 = vsub.s32 4294967266, %v114
      %v120 = vadd.s32 %v119, 127
      %v121 = vshll.u32 %v120, 23
      %v122 = vor.u32 4788187, %v121
      %v123 = vand.u32 2147483647, %v122
      %v125 = vcvt.s32.f32 %v118
      %v126 = vmul.f32 %v125, %v123
      %v127 = vxor.u32 %v126, 2147483648
      %v128 = vsel %vm45, %v127, %v126
      %v129 = vsub.s32 4, %v105
      %v130 = vsel %vm45, %v129, %v105
      %v131 = vsel %vm44, %v41, %v128
      %v132 = vsel %vm44, 0, %v130
      %v133 = vcosq.f32.pop %v131
      %v134 = vsinq.f32.pop %v131
      %vm135 = vweird.f32 %v41
      %v136 = vadd.s32 %v132, 3
      %v137 = vand.u32 %v136, 3
      %vm138 = vcmp.lt.s32.totalorder %v137, 2
      %vm139 = vcmp.eq.s32.totalorder %v137, 0
      %v140 = vxor.u32 %v134, 2147483648
      %v141 = vsel %vm139, %v133, %v140
      %vm142 = vcmp.eq.s32.totalorder %v137, 2
      %v143 = vxor.u32 %v133, 2147483648
      %v144 = vsel %vm142, %v143, %v134
      %v145 = vsel %vm138, %v141, %v144
      %v146 = vsel %vm135, nan, %v145
      %v147 = vand.u32 2147483647, %v41
      %vm148 = vcmp.le.f32.partialorder %v147, 0.7853982
      %vm149 = vcmp.lt.s32.totalorder %v41, 0
      %v150 = vand.u32 %v41, 2139095040
      %v151 = vshrl.u32 %v150, 23
      %v152 = vsub.s32 %v151, 127
      %v153 = vand.u32 2147483647, %v41
      %v154 = vand.u32 %v153, 8388607
      %v155 = vor.u32 %v154, 8388608
      %v156 = vsub.s32 0, %v155
      %v157 = vadd.s32 %v152, 1
      %vm158 = vcmp.gt.s32.totalorder %v157, 0
      %v159 = vsel %vm158, %v157, 0
      %v160 = vshrl.u32 %v159, 5
      %v161 = vand.u32 %v159, 31
      %v162 = vsub.s32 32, %v161
      %v163 = vshrl.u32 683565275, %v162
      %v164 = vshll.u32 683565275, %v161
      %v165 = vshrl.u32 2475754826, %v162
      %v166 = vor.u32 %v164, %v165
      %v167 = vshll.u32 2475754826, %v161
      %v168 = vshrl.u32 2131351028, %v162
      %v169 = vor.u32 %v167, %v168
      %v170 = vshll.u32 2131351028, %v161
      %v171 = vshrl.u32 2102212464, %v162
      %v172 = vor.u32 %v170, %v171
      %v173 = vshll.u32 2102212464, %v161
      %v174 = vshrl.u32 920167782, %v162
      %v175 = vor.u32 %v173, %v174
      %v176 = vshll.u32 920167782, %v161
      %v177 = vshrl.u32 1326507024, %v162
      %v178 = vor.u32 %v176, %v177
      %vm179 = vcmp.lt.s32.totalorder %v160, 1
      %vm180 = vcmp.lt.s32.totalorder %v160, 2
      %vm181 = vcmp.lt.s32.totalorder %v160, 3
      %vm182 = vcmp.lt.s32.totalorder %v160, 4
      %v183 = vsel %vm179, %v163, %v166
      %v184 = vsel %vm182, %v172, 2102212464
      %v185 = vsel %vm181, %v169, %v184
      %v186 = vsel %vm180, %v183, %v185
      %v187 = vsel %vm179, %v166, %v169
      %v188 = vsel %vm182, %v175, 920167782
      %v189 = vsel %vm181, %v172, %v188
      %v190 = vsel %vm180, %v187, %v189
      %v191 = vsel %vm179, %v169, %v172
      %v192 = vsel %vm182, %v178, 1326507024
      %v193 = vsel %vm181, %v175, %v192
      %v194 = vsel %vm180, %v191, %v193
      %v195 = vshll.u32 %v155, 8
      %v196 = vmul.u32.u64.compose %v195, %v194
      %v197 = vextract.low.u32 %v196
      %v198 = vextract.high.u32 %v196
      %v199 = vmul.u32.u64.compose %v195, %v190
      %v200 = vextract.low.u32 %v199
      %v201 = vextract.high.u32 %v199
      %v202 = vmul.u32 %v195, %v186
      %v203 = vadd.s32 %v198, %v200
      %vm204 = vc.u32 %v198, %v200
      %v205 = vadd.s32 %v201, 1
      %v206 = vsel %vm204, %v205, %v201
      %v207 = vadd.s32 %v202, %v206
      %v208 = vadd.s32 %v207, 536870912
      %v209 = vshrl.u32 %v208, 30
      %v210 = vshll.u32 %v209, 30
      %v211 = vsub.s32 %v207, %v210
      %vm212 = vcmp.lt.s32.totalorder %v211, 0
      %v213 = vsub.s32 0, %v211
      %v214 = vsel %vm212, %v213, %v211
      %v215 = vclz %v214
      %v216 = vsub.s32 %v215, 2
      %vm217 = vcmp.gt.s32.totalorder 0, %v216
      %v218 = vsel %vm217, 0, %v216
      %v219 = vsub.s32 32, %v218
      %v220 = vshll.u32 %v211, %v218
      %v221 = vshrl.u32 %v203, %v219
      %v222 = vor.u32 %v220, %v221
      %v223 = vsub.s32 4294967266, %v218
      %v224 = vadd.s32 %v223, 127
      %v225 = vshll.u32 %v224, 23
      %v226 = vor.u32 4788187, %v225
      %v227 = vand.u32 2147483647, %v226
      %v229 = vcvt.s32.f32 %v222
      %v230 = vmul.f32 %v229, %v227
      %v231 = vxor.u32 %v230, 2147483648
      %v232 = vsel %vm149, %v231, %v230
      %v233 = vsub.s32 4, %v209
      %v234 = vsel %vm149, %v233, %v209
      %v235 = vsel %vm148, %v41, %v232
      %v236 = vsel %vm148, 0, %v234
      %v237 = vcosq.f32.pop %v235
      %v238 = vsinq.f32.pop %v235
      %vm239 = vweird.f32 %v41
      %v240 = vand.u32 %v236, 3
      %vm241 = vcmp.lt.s32.totalorder %v240, 2
      %vm242 = vcmp.eq.s32.totalorder %v240, 0
      %v243 = vxor.u32 %v238, 2147483648
      %v244 = vsel %vm242, %v237, %v243
      %vm245 = vcmp.eq.s32.totalorder %v240, 2
      %v246 = vxor.u32 %v237, 2147483648
      %v247 = vsel %vm245, %v246, %v238
      %v248 = vsel %vm241, %v244, %v247
      %v249 = vsel %vm239, nan, %v248
      %v250 = vsel %vm42, 1, 0
      %vm251 = vcmp.eq.s32.totalorder %v250, 1
      %v252 = vsel %vm251, %v146, %v249
      %vm253 = vcmask 261120
      %254 = vst.msk [vmem:[#allocation2] sm:$0xff] %vm253, %v252
    $region13: #{tpu_custom_call.1} parent=1 // pred_fallthru
      _
    %v255 = vld [vmem:[#allocation3] sm:$0xff]
    %v256 = vld [vmem:[#allocation3 + $0x8] sm:$0xff]
    %v257 = vld [vmem:[#allocation2] sm:$0xff]
    %v258 = vadd.f32 %v255, %v257
    %v259 = vadd.f32 %v256, %v257
    %vm260 = vcmask 261120
    %261 = vst.msk [vmem:[#allocation6] sm:$0xff] %vm260, %v258
    %262 = vst.msk [vmem:[#allocation6 + $0x8] sm:$0xff] %vm260, %v259
    // Predicated region
    $region14: #{tpu_custom_call.1} parent=1 // pred_check
      _
    $region15: #{tpu_custom_call.1} parent=1 // pred_check_branch
      %264 = sbr.rel (0) target = $region17
    $region16: #{tpu_custom_call.1} parent=1 // pred_region
      %s266 = ssub.s32 256, 256
      %267 = vsyncadd [#allocation5], %s266
      %s268 = sshll.u32 [#allocation6], 4
      %s269 = int_to_ptr.vmem [resolvable:$true] %s268
      %274 = dma.vmem_to_hbm [thread:$0]  %s269, 256, %s1, [#allocation5], 128, 128, 8
    $region17: #{tpu_custom_call.1} parent=1 // pred_fallthru
      _
    // Predicated region
    $region18: #{tpu_custom_call.1} parent=1 // pred_check
      _
    $region19: #{tpu_custom_call.1} parent=1 // pred_check_branch
      %276 = sbr.rel (0) target = $region21
    $region20: #{tpu_custom_call.1} parent=1 // pred_region
      %277 = dma.done [#allocation5], 256
    $region21: #{tpu_custom_call.1} parent=1 // pred_fallthru
      _
    %278 = vsyncpa [#allocation4], 1
    %279 = vsyncpa [#allocation5], 1

</llo_original>
